<compile_context>
chip_gen: v6e
topology: v6e:2x2x1
jax: 0.10.0
libtpu: 0.0.40
codegen_flags: <defaults>
</compile_context>

<pallas_src>
import functools

import jax
import jax.numpy as jnp
from jax import lax
from jax.experimental import pallas as pl
from jax.experimental.pallas import tpu as pltpu


_MAX_TILE_B = 2048


def _round_up(x, m):
    return ((x + m - 1) // m) * m


def _pick_tile_b(batch):
    """128-aligned lane-dense tiles; >=2 grid steps for v7x when batch allows."""
    if batch <= 128:
        return batch                      # one full-array block, no ragged tail
    if batch <= 256:
        return 128                        # 2 lane-dense tiles
    half = _round_up(pl.cdiv(batch, 2), 128)
    return min(half, _MAX_TILE_B)


def _critic_kernel(n_hidden, *refs):
    """refs = (obs, act, w0_obs, w0_act, b0, [w_i, b_i]..., w_out, b_out, out).

    Weights are [out, in], biases [out, 1]; activations are [H, TILE_B]
    (batch on lanes); output block is [1, TILE_B].
    """
    obs_ref, act_ref = refs[0], refs[1]
    out_ref = refs[-1]
    p = refs[2:-1]

    # Layer 0: fused concat via split W0.  Contract the feature dim of both
    # operands (A @ B^T) so the result lands batch-on-lanes: [H0, TILE_B].
    nt = (((1,), (1,)), ((), ()))
    x = (
        lax.dot_general(p[0][...], obs_ref[...], dimension_numbers=nt,
                        preferred_element_type=jnp.float32)
        + lax.dot_general(p[1][...], act_ref[...], dimension_numbers=nt,
                          preferred_element_type=jnp.float32)
        + p[2][...]
    )
    x = jnp.maximum(x, 0.0)

    # Remaining hidden layers (unrolled at trace time): x = relu(W @ x + b).
    for i in range(1, n_hidden):
        w = p[3 + 2 * (i - 1)][...]       # [H_i, H_{i-1}]
        b = p[4 + 2 * (i - 1)][...]       # [H_i, 1]
        x = jnp.maximum(
            jnp.dot(w, x, preferred_element_type=jnp.float32) + b, 0.0
        )

    # Output layer: [1, H_last] @ [H_last, TILE_B] -> [1, TILE_B] (lane-dense).
    y = jnp.dot(p[-2][...], x, preferred_element_type=jnp.float32) + p[-1][...]
    out_ref[...] = y.astype(out_ref.dtype)


def prepare_params(params, obs_all_dim):
    """One-time prep: split W0 by (obs, act) rows and flip all layers to
    [out, in] / [out, 1] so the kernel's batch-on-lanes dataflow is natural.

    params: list of (W, b) with W [in, out], b [1, out] (nn.Linear semantics,
    W already transposed to [in, out]); last pair is the output layer (out==1).
    """
    assert len(params) >= 2, "need at least one hidden layer"
    w0, b0 = params[0]
    flat = [w0[:obs_all_dim].T, w0[obs_all_dim:].T, b0.T]   # [H0,obs],[H0,act],[H0,1]
    for w, b in params[1:-1]:
        flat.extend((w.T, b.T))                             # [H_i,H_{i-1}], [H_i,1]
    w_o, b_o = params[-1]
    flat.extend((w_o.T, b_o))                               # [1, H_last], [1, 1]
    return [jnp.asarray(a) for a in flat]


def critic_forward(obs, act, flat_params):
    """obs: [B, obs_all_dim], act: [B, act_all_dim]; returns [B, 1]."""
    batch, obs_dim = obs.shape
    act_dim = act.shape[1]
    n_hidden = (len(flat_params) - 3) // 2

    tile_b = _pick_tile_b(batch)
    grid = (pl.cdiv(batch, tile_b),)

    # Weights/biases: full-array blocks, constant index_map -> VMEM resident.
    param_specs = [pl.BlockSpec(p.shape, lambda i: (0, 0)) for p in flat_params]

    kernel = functools.partial(_critic_kernel, n_hidden)
    out = pl.pallas_call(
        kernel,
        out_shape=jax.ShapeDtypeStruct((1, batch), jnp.float32),
        grid=grid,
        in_specs=[
            pl.BlockSpec((tile_b, obs_dim), lambda i: (i, 0)),
            pl.BlockSpec((tile_b, act_dim), lambda i: (i, 0)),
            *param_specs,
        ],
        out_specs=pl.BlockSpec((1, tile_b), lambda i: (0, i)),
        compiler_params=pltpu.CompilerParams(
            dimension_semantics=("parallel",),
            vmem_limit_bytes=32 * 1024 * 1024,
        ),
    )(obs, act, *flat_params)

    # [1, B] with batch on lanes -> [B, 1]; row-major identical, free reshape.
    return out.reshape(batch, 1)


def init_params(key, obs_one_dim, act_one_dim, hidden_layers_size, agent_num):
    """Deterministic synthetic init matching the PyTorch module's shapes."""
    obs_all_dim = obs_one_dim * agent_num
    act_all_dim = act_one_dim * agent_num
    size_in = obs_all_dim + act_all_dim
    params = []
    sizes = list(hidden_layers_size) + [1]
    for size_out in sizes:
        key, kw, kb = jax.random.split(key, 3)
        bound = 1.0 / jnp.sqrt(jnp.float32(size_in))
        w = jax.random.uniform(
            kw, (size_in, size_out), dtype=jnp.float32, minval=-bound, maxval=bound
        )
        b = jax.random.uniform(
            kb, (1, size_out), dtype=jnp.float32, minval=-bound, maxval=bound
        )
        params.append((w, b))
        size_in = size_out
    return params


def critic_reference(obs, act, params):
    """Pure-JAX reference of the PyTorch forward for validation."""
    x = jnp.concatenate((obs, act), axis=1)
    for w, b in params[:-1]:
        x = jnp.maximum(x @ w + b, 0.0)
    w, b = params[-1]
    return x @ w + b


if __name__ == "__main__":
    # Module config (small, consistent with the forward semantics).
    obs_one_dim = 6
    act_one_dim = 4
    agent_num = 3
    hidden_layers_size = [32, 32]

    obs_all_dim = obs_one_dim * agent_num   # 18
    act_all_dim = act_one_dim * agent_num   # 12

    key = jax.random.PRNGKey(0)
    k_params, k_data = jax.random.split(key)
    params = init_params(
        k_params, obs_one_dim, act_one_dim, hidden_layers_size, agent_num
    )
    flat_params = prepare_params(params, obs_all_dim)

    # Exercise: tiny batch (single full-array block), mid batch with a ragged
    # boundary tile (384 -> two 256-row tiles), larger batch with big tiles
    # (2500 -> two 1280-row tiles, ragged tail).
    for batch in (2, 384, 2500):
        k_data, k_obs, k_act = jax.random.split(k_data, 3)
        obs = jax.random.normal(k_obs, (batch, obs_all_dim), dtype=jnp.float32)
        act = jax.random.normal(k_act, (batch, act_all_dim), dtype=jnp.float32)
        out = jax.block_until_ready(critic_forward(obs, act, flat_params))
        ref = critic_reference(obs, act, params)
        assert out.shape == (batch, 1), (batch, out.shape)
        assert jnp.allclose(out, ref, atol=1e-4, rtol=1e-4), (
            batch, float(jnp.max(jnp.abs(out - ref)))
        )

    print("KERNEL_OK")
</pallas_src>

<mosaic_0001>
module attributes {stable_mosaic.version = 11 : i64} {
  func.func @_critic_kernel(%arg0: i32, %arg1: memref<2x18xf32, #tpu.memory_space<vmem>>, %arg2: memref<2x12xf32, #tpu.memory_space<vmem>>, %arg3: memref<32x18xf32, #tpu.memory_space<vmem>>, %arg4: memref<32x12xf32, #tpu.memory_space<vmem>>, %arg5: memref<32x1xf32, #tpu.memory_space<vmem>>, %arg6: memref<32x32xf32, #tpu.memory_space<vmem>>, %arg7: memref<32x1xf32, #tpu.memory_space<vmem>>, %arg8: memref<1x32xf32, #tpu.memory_space<vmem>>, %arg9: memref<1x1xf32, #tpu.memory_space<vmem>>, %arg10: memref<1x2xf32, #tpu.memory_space<vmem>>) attributes {dimension_semantics = [#tpu.dimension_semantics<parallel>], iteration_bounds = array<i64: 1>, scalar_prefetch = 0 : i64, scratch_operands = 0 : i64, tpu.core_type = #tpu.core_type<tc>, window_params = [{transform_indices = @transform_0, window_bounds = array<i64: 2, 18>}, {transform_indices = @transform_1, window_bounds = array<i64: 2, 12>}, {pipeline_mode = #tpu.pipeline_mode<synchronous>, transform_indices = @transform_2, window_bounds = array<i64: 32, 18>}, {pipeline_mode = #tpu.pipeline_mode<synchronous>, transform_indices = @transform_3, window_bounds = array<i64: 32, 12>}, {pipeline_mode = #tpu.pipeline_mode<synchronous>, transform_indices = @transform_4, window_bounds = array<i64: 32, 1>}, {pipeline_mode = #tpu.pipeline_mode<synchronous>, transform_indices = @transform_5, window_bounds = array<i64: 32, 32>}, {pipeline_mode = #tpu.pipeline_mode<synchronous>, transform_indices = @transform_6, window_bounds = array<i64: 32, 1>}, {pipeline_mode = #tpu.pipeline_mode<synchronous>, transform_indices = @transform_7, window_bounds = array<i64: 1, 32>}, {pipeline_mode = #tpu.pipeline_mode<synchronous>, transform_indices = @transform_8, window_bounds = array<i64: 1, 1>}, {transform_indices = @transform_9, window_bounds = array<i64: 1, 2>}]} {
    %c0 = arith.constant 0 : index
    %c0_0 = arith.constant 0 : index
    %0 = vector.load %arg3[%c0, %c0_0] : memref<32x18xf32, #tpu.memory_space<vmem>>, vector<32x18xf32>
    %c0_1 = arith.constant 0 : index
    %c0_2 = arith.constant 0 : index
    %1 = vector.load %arg1[%c0_1, %c0_2] : memref<2x18xf32, #tpu.memory_space<vmem>>, vector<2x18xf32>
    %cst = arith.constant dense<0.000000e+00> : vector<32x2xf32>
    %2 = tpu.matmul %0, %1, %cst {dimension_numbers = #tpu.dot_dimension_numbers<[1], [1], [0], [0], [0, 0, 1, 0], [], []>} : vector<32x18xf32>, vector<2x18xf32>, vector<32x2xf32> -> vector<32x2xf32>
    %c0_3 = arith.constant 0 : index
    %c0_4 = arith.constant 0 : index
    %3 = vector.load %arg4[%c0_3, %c0_4] : memref<32x12xf32, #tpu.memory_space<vmem>>, vector<32x12xf32>
    %c0_5 = arith.constant 0 : index
    %c0_6 = arith.constant 0 : index
    %4 = vector.load %arg2[%c0_5, %c0_6] : memref<2x12xf32, #tpu.memory_space<vmem>>, vector<2x12xf32>
    %cst_7 = arith.constant dense<0.000000e+00> : vector<32x2xf32>
    %5 = tpu.matmul %3, %4, %cst_7 {dimension_numbers = #tpu.dot_dimension_numbers<[1], [1], [0], [0], [0, 0, 1, 0], [], []>} : vector<32x12xf32>, vector<2x12xf32>, vector<32x2xf32> -> vector<32x2xf32>
    %6 = arith.addf %2, %5 : vector<32x2xf32>
    %c0_8 = arith.constant 0 : index
    %c0_9 = arith.constant 0 : index
    %7 = vector.load %arg5[%c0_8, %c0_9] : memref<32x1xf32, #tpu.memory_space<vmem>>, vector<32x1xf32>
    %8 = vector.broadcast %7 : vector<32x1xf32> to vector<32x2xf32>
    %9 = arith.addf %6, %8 : vector<32x2xf32>
    %cst_10 = arith.constant 0.000000e+00 : f32
    %10 = vector.broadcast %cst_10 : f32 to vector<32x2xf32>
    %11 = arith.maximumf %9, %10 : vector<32x2xf32>
    %c0_11 = arith.constant 0 : index
    %c0_12 = arith.constant 0 : index
    %12 = vector.load %arg6[%c0_11, %c0_12] : memref<32x32xf32, #tpu.memory_space<vmem>>, vector<32x32xf32>
    %c0_13 = arith.constant 0 : index
    %c0_14 = arith.constant 0 : index
    %13 = vector.load %arg7[%c0_13, %c0_14] : memref<32x1xf32, #tpu.memory_space<vmem>>, vector<32x1xf32>
    %cst_15 = arith.constant dense<0.000000e+00> : vector<32x2xf32>
    %14 = tpu.matmul %12, %11, %cst_15 {dimension_numbers = #tpu.dot_dimension_numbers<[1], [0], [0], [1], [0, 0, 1, 1], [], []>} : vector<32x32xf32>, vector<32x2xf32>, vector<32x2xf32> -> vector<32x2xf32>
    %15 = vector.broadcast %13 : vector<32x1xf32> to vector<32x2xf32>
    %16 = arith.addf %14, %15 : vector<32x2xf32>
    %cst_16 = arith.constant 0.000000e+00 : f32
    %17 = vector.broadcast %cst_16 : f32 to vector<32x2xf32>
    %18 = arith.maximumf %16, %17 : vector<32x2xf32>
    %c0_17 = arith.constant 0 : index
    %c0_18 = arith.constant 0 : index
    %19 = vector.load %arg8[%c0_17, %c0_18] : memref<1x32xf32, #tpu.memory_space<vmem>>, vector<1x32xf32>
    %cst_19 = arith.constant dense<0.000000e+00> : vector<1x2xf32>
    %20 = tpu.matmul %19, %18, %cst_19 {dimension_numbers = #tpu.dot_dimension_numbers<[1], [0], [0], [1], [0, 0, 1, 1], [], []>} : vector<1x32xf32>, vector<32x2xf32>, vector<1x2xf32> -> vector<1x2xf32>
    %c0_20 = arith.constant 0 : index
    %c0_21 = arith.constant 0 : index
    %21 = vector.load %arg9[%c0_20, %c0_21] : memref<1x1xf32, #tpu.memory_space<vmem>>, vector<1x1xf32>
    %22 = vector.broadcast %21 : vector<1x1xf32> to vector<1x2xf32>
    %23 = arith.addf %20, %22 : vector<1x2xf32>
    %c0_22 = arith.constant 0 : index
    %c0_23 = arith.constant 0 : index
    %24 = vector.load %arg10[%c0_22, %c0_23] : memref<1x2xf32, #tpu.memory_space<vmem>>, vector<1x2xf32>
    tpu.vector_store %arg10[%c0_22, %c0_23], %23 {strides = array<i32>} : memref<1x2xf32, #tpu.memory_space<vmem>>, vector<1x2xf32>,
    return
  }
  func.func @transform_0(%arg0: i32) -> (i32, i32) {
    %c0_i32 = arith.constant 0 : i32
    %c0_i32_0 = arith.constant 0 : i32
    return %arg0, %c0_i32 : i32, i32
  }
  func.func @transform_1(%arg0: i32) -> (i32, i32) {
    %c0_i32 = arith.constant 0 : i32
    %c0_i32_0 = arith.constant 0 : i32
    return %arg0, %c0_i32 : i32, i32
  }
  func.func @transform_2(%arg0: i32) -> (i32, i32) {
    %c0_i32 = arith.constant 0 : i32
    %c0_i32_0 = arith.constant 0 : i32
    %c0_i32_1 = arith.constant 0 : i32
    return %c0_i32, %c0_i32_0 : i32, i32
  }
  func.func @transform_3(%arg0: i32) -> (i32, i32) {
    %c0_i32 = arith.constant 0 : i32
    %c0_i32_0 = arith.constant 0 : i32
    %c0_i32_1 = arith.constant 0 : i32
    return %c0_i32, %c0_i32_0 : i32, i32
  }
  func.func @transform_4(%arg0: i32) -> (i32, i32) {
    %c0_i32 = arith.constant 0 : i32
    %c0_i32_0 = arith.constant 0 : i32
    %c0_i32_1 = arith.constant 0 : i32
    return %c0_i32, %c0_i32_0 : i32, i32
  }
  func.func @transform_5(%arg0: i32) -> (i32, i32) {
    %c0_i32 = arith.constant 0 : i32
    %c0_i32_0 = arith.constant 0 : i32
    %c0_i32_1 = arith.constant 0 : i32
    return %c0_i32, %c0_i32_0 : i32, i32
  }
  func.func @transform_6(%arg0: i32) -> (i32, i32) {
    %c0_i32 = arith.constant 0 : i32
    %c0_i32_0 = arith.constant 0 : i32
    %c0_i32_1 = arith.constant 0 : i32
    return %c0_i32, %c0_i32_0 : i32, i32
  }
  func.func @transform_7(%arg0: i32) -> (i32, i32) {
    %c0_i32 = arith.constant 0 : i32
    %c0_i32_0 = arith.constant 0 : i32
    %c0_i32_1 = arith.constant 0 : i32
    return %c0_i32, %c0_i32_0 : i32, i32
  }
  func.func @transform_8(%arg0: i32) -> (i32, i32) {
    %c0_i32 = arith.constant 0 : i32
    %c0_i32_0 = arith.constant 0 : i32
    %c0_i32_1 = arith.constant 0 : i32
    return %c0_i32, %c0_i32_0 : i32, i32
  }
  func.func @transform_9(%arg0: i32) -> (i32, i32) {
    %c0_i32 = arith.constant 0 : i32
    %c0_i32_0 = arith.constant 0 : i32
    return %c0_i32, %arg0 : i32, i32
  }
}

</mosaic_0001>

<llo_original>
// kernel: tpu_custom_call.1
$region0: #{tpu_custom_call.1}
  #allocation0 [shape = 'u32[]', space=smem, size = 0x4, offset = 0x4, fixed_abs, tag = 'smem constant byte address 0x4 - core index']
  #allocation1 [shape = 'u32[144,128]{1,0:T(1,128)}', space=vmem, size = 0x12000, scoped, tag = 'internal scratch']
  #allocation2 [shape = 'f32[1,1]{1,0:T(1,128)S(1)}', space=vmem, size = 0x200, scoped, tag = 'scoped memory for tpu_custom_call.1']
  %s0 = inlined_call_operand.vmem [shape: f32[2,18], index: 0, kind: input, shape index: {}]
  %s1 = inlined_call_operand.vmem [shape: f32[2,12], index: 1, kind: input, shape index: {}]
  %s2 = inlined_call_operand.vmem [shape: f32[32,18], index: 2, kind: input, shape index: {}]
  %s3 = inlined_call_operand.vmem [shape: f32[32,12], index: 3, kind: input, shape index: {}]
  %s4 = inlined_call_operand.vmem [shape: f32[32,1], index: 4, kind: input, shape index: {}]
  %s5 = inlined_call_operand.vmem [shape: f32[32,32], index: 5, kind: input, shape index: {}]
  %s6 = inlined_call_operand.vmem [shape: f32[32,1], index: 6, kind: input, shape index: {}]
  %s7 = inlined_call_operand.vmem [shape: f32[1,32], index: 7, kind: input, shape index: {}]
  %s8 = inlined_call_operand.<no memory space> [shape: f32[1,1], index: 8, kind: input, shape index: {}]
  %s9 = inlined_call_operand.hbm [shape: f32[1,2], index: 9, kind: output, shape index: {}]
  %s10 = sld [smem:[#allocation0]]
  $region46: #{tpu_custom_call.1} parent=0
    _
  %s12 = ssub.s32 1, %s10
  %s13 = scalar_select 0, %s12, %s10
  %v14 = vstv %s8
  %15 = vst [vmem:[#allocation2] sm:$0x1] %v14
  $region1: #{tpu_custom_call.1} parent=0
    #allocation3 [shape = 'u8[512]{0}', space=vmem, size = 0x400, scoped, tag = 'output window, operand 0, single buffered']
    #allocation4 [shape = 's32[1]{0}', space=sflag, size = 0x4, scoped, tag = 'scoped memory for tpu_custom_call.1']
    %16 = vsyncpa [#allocation4], 0
    // Predicated region
    $region2: #{tpu_custom_call.1} parent=1 // pred_check
      _
    $region3: #{tpu_custom_call.1} parent=1 // pred_check_branch
      %18 = sbr.rel (0) target = $region5
    $region4: #{tpu_custom_call.1} parent=1 // pred_region
      _
    $region5: #{tpu_custom_call.1} parent=1 // pred_fallthru
      _
    // Predicated region
    $region6: #{tpu_custom_call.1} parent=1 // pred_check
      _
    $region7: #{tpu_custom_call.1} parent=1 // pred_check_branch
      %20 = sbr.rel (0) target = $region9
    $region8: #{tpu_custom_call.1} parent=1 // pred_region
      _
    $region9: #{tpu_custom_call.1} parent=1 // pred_fallthru
      _
    // Predicated region
    $region10: #{tpu_custom_call.1} parent=1 // pred_check
      _
    $region11: #{tpu_custom_call.1} parent=1 // pred_check_branch
      %22 = sbr.rel (0) target = $region13
    $region12: #{tpu_custom_call.1} parent=1 // pred_region
      _
    $region13: #{tpu_custom_call.1} parent=1 // pred_fallthru
      _
    // Predicated region
    $region14: #{tpu_custom_call.1} parent=1 // pred_check
      _
    $region15: #{tpu_custom_call.1} parent=1 // pred_check_branch
      %24 = sbr.rel (0) target = $region17
    $region16: #{tpu_custom_call.1} parent=1 // pred_region
      _
    $region17: #{tpu_custom_call.1} parent=1 // pred_fallthru
      _
    // Predicated region
    $region18: #{tpu_custom_call.1} parent=1 // pred_check
      _
    $region19: #{tpu_custom_call.1} parent=1 // pred_check_branch
      %26 = sbr.rel (0) target = $region21
    $region20: #{tpu_custom_call.1} parent=1 // pred_region
      _
    $region21: #{tpu_custom_call.1} parent=1 // pred_fallthru
      _
    // Predicated region
    $region22: #{tpu_custom_call.1} parent=1 // pred_check
      _
    $region23: #{tpu_custom_call.1} parent=1 // pred_check_branch
      %28 = sbr.rel (0) target = $region25
    $region24: #{tpu_custom_call.1} parent=1 // pred_region
      _
    $region25: #{tpu_custom_call.1} parent=1 // pred_fallthru
      _
    // Predicated region
    $region26: #{tpu_custom_call.1} parent=1 // pred_check
      _
    $region27: #{tpu_custom_call.1} parent=1 // pred_check_branch
      %30 = sbr.rel (0) target = $region29
    $region28: #{tpu_custom_call.1} parent=1 // pred_region
      _
    $region29: #{tpu_custom_call.1} parent=1 // pred_fallthru
      _
    // Predicated region
    $region30: #{tpu_custom_call.1} parent=1 // pred_check
      _
    $region31: #{tpu_custom_call.1} parent=1 // pred_check_branch
      %32 = sbr.rel (0) target = $region33
    $region32: #{tpu_custom_call.1} parent=1 // pred_region
      _
    $region33: #{tpu_custom_call.1} parent=1 // pred_fallthru
      _
    // Predicated region
    $region34: #{tpu_custom_call.1} parent=1 // pred_check
      _
    $region35: #{tpu_custom_call.1} parent=1 // pred_check_branch
      %34 = sbr.rel (0) target = $region37
    $region36: #{tpu_custom_call.1} parent=1 // pred_region
      _
    $region37: #{tpu_custom_call.1} parent=1 // pred_fallthru
      _
    %v35 = vld [vmem:[%s2] sm:$0xff]
    %v36 = vld [vmem:[%s2 + $0x8] sm:$0xff]
    %v37 = vld [vmem:[%s2 + $0x10] sm:$0xff]
    %v38 = vld [vmem:[%s2 + $0x18] sm:$0xff]
    %v39 = vld [vmem:[%s0] sm:$0x3]
    %v40 = vld [vmem:[%s3] sm:$0xff]
    %v41 = vld [vmem:[%s3 + $0x8] sm:$0xff]
    %v42 = vld [vmem:[%s3 + $0x10] sm:$0xff]
    %v43 = vld [vmem:[%s3 + $0x18] sm:$0xff]
    %v44 = vld [vmem:[%s1] sm:$0x3]
    %vm45 = vcmask 97280
    %v47 = vsel %vm45, %v40, 0
    %v50 = vsel %vm45, %v41, 0
    %v53 = vsel %vm45, %v42, 0
    %v56 = vsel %vm45, %v43, 0
    %v59 = vsel %vm45, %v44, 0
    %61 = vmatprep.subr.mxu0 0.0
    %62 = vmatpush1.xpose.msra.mxu0 0.0
    %63 = vmatprep.subr.mxu0 0.0
    %64 = vmatpush1.xpose.msra.mxu0 0.0
    %65 = vmatprep.subr.mxu0 0.0
    %66 = vmatpush1.xpose.msra.mxu0 0.0
    %67 = vmatprep.subr.mxu0 0.0
    %68 = vmatpush1.xpose.msra.mxu0 0.0
    %69 = vmatprep.subr.mxu0 0.0
    %70 = vmatpush1.xpose.msra.mxu0 0.0
    %71 = vmatprep.subr.mxu0 0.0
    %72 = vmatpush1.xpose.msra.mxu0 0.0
    %73 = vmatprep.subr.mxu0 0.0
    %74 = vmatpush1.xpose.msra.mxu0 0.0
    %75 = vmatprep.subr.mxu0 0.0
    %76 = vmatpush1.xpose.msra.mxu0 0.0
    %77 = vmatprep.subr.mxu0 0.0
    %78 = vmatpush1.xpose.msra.mxu0 0.0
    %79 = vmatprep.subr.mxu0 0.0
    %80 = vmatpush1.xpose.msra.mxu0 0.0
    %81 = vmatprep.subr.mxu0 0.0
    %82 = vmatpush1.xpose.msra.mxu0 0.0
    %83 = vmatprep.subr.mxu0 0.0
    %84 = vmatpush1.xpose.msra.mxu0 0.0
    %85 = vmatprep.subr.mxu0 0.0
    %86 = vmatpush1.xpose.msra.mxu0 0.0
    %87 = vmatprep.subr.mxu0 0.0
    %88 = vmatpush1.xpose.msra.mxu0 0.0
    %89 = vmatprep.subr.mxu0 0.0
    %90 = vmatpush1.xpose.msra.mxu0 0.0
    %91 = vmatprep.subr.mxu0 0.0
    %92 = vmatpush1.xpose.msra.mxu0 %v59
    %93 = vmatprep.subr.mxu0 0.0
    %94 = vmatpush2.xpose.msra.mxu0 0.0
    %95 = vmatprep.subr.mxu0 0.0
    %96 = vmatpush2.xpose.msra.mxu0 0.0
    %97 = vmatprep.subr.mxu0 0.0
    %98 = vmatpush2.xpose.msra.mxu0 0.0
    %99 = vmatprep.subr.mxu0 0.0
    %100 = vmatpush2.xpose.msra.mxu0 0.0
    %101 = vmatprep.subr.mxu0 0.0
    %102 = vmatpush2.xpose.msra.mxu0 0.0
    %103 = vmatprep.subr.mxu0 0.0
    %104 = vmatpush2.xpose.msra.mxu0 0.0
    %105 = vmatprep.subr.mxu0 0.0
    %106 = vmatpush2.xpose.msra.mxu0 0.0
    %107 = vmatprep.subr.mxu0 0.0
    %108 = vmatpush2.xpose.msra.mxu0 0.0
    %109 = vmatprep.subr.mxu0 0.0
    %110 = vmatpush2.xpose.msra.mxu0 0.0
    %111 = vmatprep.subr.mxu0 0.0
    %112 = vmatpush2.xpose.msra.mxu0 0.0
    %113 = vmatprep.subr.mxu0 0.0
    %114 = vmatpush2.xpose.msra.mxu0 0.0
    %115 = vmatprep.subr.mxu0 0.0
    %116 = vmatpush2.xpose.msra.mxu0 0.0
    %117 = vmatprep.subr.mxu0 0.0
    %118 = vmatpush2.xpose.msra.mxu0 0.0
    %119 = vmatprep.subr.mxu0 0.0
    %120 = vmatpush2.xpose.msra.mxu0 0.0
    %121 = vmatprep.subr.mxu0 0.0
    %122 = vmatpush2.xpose.msra.mxu0 0.0
    %123 = vmatprep.subr.mxu0 0.0
    %124 = vmatpush2.xpose.msra.mxu0 0.0
    %125 = vmatprep.mubr.f32.mxu0 0.0
    %126 = vmatmul.mubr.f32.gmra.mxu0 %v47
    %v127 = vpop.f32.mrf.mxu0
    %v128 = vadd.f32 0.0, %v127
    %v129 = vpop.f32.mrf.mxu0
    %130 = vmatprep.mubr.f32.mxu0 0.0
    %131 = vmatmul.mubr.f32.gmra.mxu0 %v50
    %v132 = vpop.f32.mrf.mxu0
    %v133 = vadd.f32 0.0, %v132
    %v134 = vpop.f32.mrf.mxu0
    %135 = vmatprep.mubr.f32.mxu0 0.0
    %136 = vmatmul.mubr.f32.gmra.mxu0 %v53
    %v137 = vpop.f32.mrf.mxu0
    %v138 = vadd.f32 0.0, %v137
    %v139 = vpop.f32.mrf.mxu0
    %140 = vmatprep.mubr.f32.mxu0 0.0
    %141 = vmatmul.mubr.f32.gmra.mxu0 %v56
    %v142 = vpop.f32.mrf.mxu0
    %v143 = vadd.f32 0.0, %v142
    %v144 = vpop.f32.mrf.mxu0
    %145 = vdwg.mxu0
    %vm146 = vcmask 146432
    %v148 = vsel %vm146, %v35, 0
    %v151 = vsel %vm146, %v36, 0
    %v154 = vsel %vm146, %v37, 0
    %v157 = vsel %vm146, %v38, 0
    %v160 = vsel %vm146, %v39, 0
    %162 = vmatprep.subr.mxu0 0.0
    %163 = vmatpush1.xpose.msra.mxu0 0.0
    %164 = vmatprep.subr.mxu0 0.0
    %165 = vmatpush1.xpose.msra.mxu0 0.0
    %166 = vmatprep.subr.mxu0 0.0
    %167 = vmatpush1.xpose.msra.mxu0 0.0
    %168 = vmatprep.subr.mxu0 0.0
    %169 = vmatpush1.xpose.msra.mxu0 0.0
    %170 = vmatprep.subr.mxu0 0.0
    %171 = vmatpush1.xpose.msra.mxu0 0.0
    %172 = vmatprep.subr.mxu0 0.0
    %173 = vmatpush1.xpose.msra.mxu0 0.0
    %174 = vmatprep.subr.mxu0 0.0
    %175 = vmatpush1.xpose.msra.mxu0 0.0
    %176 = vmatprep.subr.mxu0 0.0
    %177 = vmatpush1.xpose.msra.mxu0 0.0
    %178 = vmatprep.subr.mxu0 0.0
    %179 = vmatpush1.xpose.msra.mxu0 0.0
    %180 = vmatprep.subr.mxu0 0.0
    %181 = vmatpush1.xpose.msra.mxu0 0.0
    %182 = vmatprep.subr.mxu0 0.0
    %183 = vmatpush1.xpose.msra.mxu0 0.0
    %184 = vmatprep.subr.mxu0 0.0
    %185 = vmatpush1.xpose.msra.mxu0 0.0
    %186 = vmatprep.subr.mxu0 0.0
    %187 = vmatpush1.xpose.msra.mxu0 0.0
    %188 = vmatprep.subr.mxu0 0.0
    %189 = vmatpush1.xpose.msra.mxu0 0.0
    %190 = vmatprep.subr.mxu0 0.0
    %191 = vmatpush1.xpose.msra.mxu0 0.0
    %192 = vmatprep.subr.mxu0 0.0
    %193 = vmatpush1.xpose.msra.mxu0 %v160
    %194 = vmatprep.subr.mxu0 0.0
    %195 = vmatpush2.xpose.msra.mxu0 0.0
    %196 = vmatprep.subr.mxu0 0.0
    %197 = vmatpush2.xpose.msra.mxu0 0.0
    %198 = vmatprep.subr.mxu0 0.0
    %199 = vmatpush2.xpose.msra.mxu0 0.0
    %200 = vmatprep.subr.mxu0 0.0
    %201 = vmatpush2.xpose.msra.mxu0 0.0
    %202 = vmatprep.subr.mxu0 0.0
    %203 = vmatpush2.xpose.msra.mxu0 0.0
    %204 = vmatprep.subr.mxu0 0.0
    %205 = vmatpush2.xpose.msra.mxu0 0.0
    %206 = vmatprep.subr.mxu0 0.0
    %207 = vmatpush2.xpose.msra.mxu0 0.0
    %208 = vmatprep.subr.mxu0 0.0
    %209 = vmatpush2.xpose.msra.mxu0 0.0
    %210 = vmatprep.subr.mxu0 0.0
    %211 = vmatpush2.xpose.msra.mxu0 0.0
    %212 = vmatprep.subr.mxu0 0.0
    %213 = vmatpush2.xpose.msra.mxu0 0.0
    %214 = vmatprep.subr.mxu0 0.0
    %215 = vmatpush2.xpose.msra.mxu0 0.0
    %216 = vmatprep.subr.mxu0 0.0
    %217 = vmatpush2.xpose.msra.mxu0 0.0
    %218 = vmatprep.subr.mxu0 0.0
    %219 = vmatpush2.xpose.msra.mxu0 0.0
    %220 = vmatprep.subr.mxu0 0.0
    %221 = vmatpush2.xpose.msra.mxu0 0.0
    %222 = vmatprep.subr.mxu0 0.0
    %223 = vmatpush2.xpose.msra.mxu0 0.0
    %224 = vmatprep.subr.mxu0 0.0
    %225 = vmatpush2.xpose.msra.mxu0 0.0
    %226 = vmatprep.mubr.f32.mxu0 0.0
    %227 = vmatmul.mubr.f32.gmra.mxu0 %v148
    %v228 = vpop.f32.mrf.mxu0
    %v229 = vadd.f32 %v128, %v228
    %v230 = vpop.f32.mrf.mxu0
    %231 = vmatprep.mubr.f32.mxu0 0.0
    %232 = vmatmul.mubr.f32.gmra.mxu0 %v151
    %v233 = vpop.f32.mrf.mxu0
    %v234 = vadd.f32 %v133, %v233
    %v235 = vpop.f32.mrf.mxu0
    %236 = vmatprep.mubr.f32.mxu0 0.0
    %237 = vmatmul.mubr.f32.gmra.mxu0 %v154
    %v238 = vpop.f32.mrf.mxu0
    %v239 = vadd.f32 %v138, %v238
    %v240 = vpop.f32.mrf.mxu0
    %241 = vmatprep.mubr.f32.mxu0 0.0
    %242 = vmatmul.mubr.f32.gmra.mxu0 %v157
    %v243 = vpop.f32.mrf.mxu0
    %v244 = vadd.f32 %v143, %v243
    %v245 = vpop.f32.mrf.mxu0
    %246 = vdwg.mxu0
    %v247 = vld [vmem:[%s4] sm:$0xff]
    %v248 = vld [vmem:[%s4 + $0x8] sm:$0xff]
    %v249 = vld [vmem:[%s4 + $0x10] sm:$0xff]
    %v250 = vld [vmem:[%s4 + $0x18] sm:$0xff]
    %252 = vset.pattern.permute.xlu0 0
    %253 = vperm.xlu0 %252, %v247
    %v254 = vpop.permute.xlu0 %253
    %257 = vset.pattern.permute.xlu0 0
    %258 = vperm.xlu0 %257, %v248
    %v259 = vpop.permute.xlu0 %258
    %262 = vset.pattern.permute.xlu0 0
    %263 = vperm.xlu0 %262, %v249
    %v264 = vpop.permute.xlu0 %263
    %267 = vset.pattern.permute.xlu0 0
    %268 = vperm.xlu0 %267, %v250
    %v269 = vpop.permute.xlu0 %268
    %v271 = vadd.f32 %v229, %v254
    %v272 = vadd.f32 %v234, %v259
    %v273 = vadd.f32 %v239, %v264
    %v274 = vadd.f32 %v244, %v269
    %v275 = vmax.f32 %v271, 0.0
    %v276 = vmax.f32 %v272, 0.0
    %v277 = vmax.f32 %v273, 0.0
    %v278 = vmax.f32 %v274, 0.0
    %v279 = vld [vmem:[%s5] sm:$0xff]
    %v280 = vld [vmem:[%s5 + $0x8] sm:$0xff]
    %v281 = vld [vmem:[%s5 + $0x10] sm:$0xff]
    %v282 = vld [vmem:[%s5 + $0x18] sm:$0xff]
    %v283 = vld [vmem:[%s6] sm:$0xff]
    %v284 = vld [vmem:[%s6 + $0x8] sm:$0xff]
    %v285 = vld [vmem:[%s6 + $0x10] sm:$0xff]
    %v286 = vld [vmem:[%s6 + $0x18] sm:$0xff]
    %288 = vset.pattern.permute.xlu0 0
    %289 = vperm.xlu0 %288, %v283
    %v290 = vpop.permute.xlu0 %289
    %293 = vset.pattern.permute.xlu0 0
    %294 = vperm.xlu0 %293, %v284
    %v295 = vpop.permute.xlu0 %294
    %298 = vset.pattern.permute.xlu0 0
    %299 = vperm.xlu0 %298, %v285
    %v300 = vpop.permute.xlu0 %299
    %303 = vset.pattern.permute.xlu0 0
    %304 = vperm.xlu0 %303, %v286
    %v305 = vpop.permute.xlu0 %304
    %vm307 = vcmask 261120
    %v309 = vsel %vm307, %v279, 0
    %v312 = vsel %vm307, %v280, 0
    %v315 = vsel %vm307, %v281, 0
    %v318 = vsel %vm307, %v282, 0
    %320 = vmatprep.subr.mxu0 0.0
    %321 = vmatpush1.msra.mxu0 0.0
    %322 = vmatprep.subr.mxu0 0.0
    %323 = vmatpush1.msra.mxu0 0.0
    %324 = vmatprep.subr.mxu0 0.0
    %325 = vmatpush1.msra.mxu0 0.0
    %326 = vmatprep.subr.mxu0 0.0
    %327 = vmatpush1.msra.mxu0 0.0
    %328 = vmatprep.subr.mxu0 0.0
    %329 = vmatpush1.msra.mxu0 0.0
    %330 = vmatprep.subr.mxu0 0.0
    %331 = vmatpush1.msra.mxu0 0.0
    %332 = vmatprep.subr.mxu0 0.0
    %333 = vmatpush1.msra.mxu0 0.0
    %334 = vmatprep.subr.mxu0 0.0
    %335 = vmatpush1.msra.mxu0 0.0
    %336 = vmatprep.subr.mxu0 0.0
    %337 = vmatpush1.msra.mxu0 0.0
    %338 = vmatprep.subr.mxu0 0.0
    %339 = vmatpush1.msra.mxu0 0.0
    %340 = vmatprep.subr.mxu0 0.0
    %341 = vmatpush1.msra.mxu0 0.0
    %342 = vmatprep.subr.mxu0 0.0
    %343 = vmatpush1.msra.mxu0 0.0
    %344 = vmatprep.subr.mxu0 0.0
    %345 = vmatpush1.msra.mxu0 %v278
    %346 = vmatprep.subr.mxu0 0.0
    %347 = vmatpush1.msra.mxu0 %v277
    %348 = vmatprep.subr.mxu0 0.0
    %349 = vmatpush1.msra.mxu0 %v276
    %350 = vmatprep.subr.mxu0 0.0
    %351 = vmatpush1.msra.mxu0 %v275
    %352 = vmatprep.subr.mxu0 0.0
    %353 = vmatpush2.msra.mxu0 0.0
    %354 = vmatprep.subr.mxu0 0.0
    %355 = vmatpush2.msra.mxu0 0.0
    %356 = vmatprep.subr.mxu0 0.0
    %357 = vmatpush2.msra.mxu0 0.0
    %358 = vmatprep.subr.mxu0 0.0
    %359 = vmatpush2.msra.mxu0 0.0
    %360 = vmatprep.subr.mxu0 0.0
    %361 = vmatpush2.msra.mxu0 0.0
    %362 = vmatprep.subr.mxu0 0.0
    %363 = vmatpush2.msra.mxu0 0.0
    %364 = vmatprep.subr.mxu0 0.0
    %365 = vmatpush2.msra.mxu0 0.0
    %366 = vmatprep.subr.mxu0 0.0
    %367 = vmatpush2.msra.mxu0 0.0
    %368 = vmatprep.subr.mxu0 0.0
    %369 = vmatpush2.msra.mxu0 0.0
    %370 = vmatprep.subr.mxu0 0.0
    %371 = vmatpush2.msra.mxu0 0.0
    %372 = vmatprep.subr.mxu0 0.0
    %373 = vmatpush2.msra.mxu0 0.0
    %374 = vmatprep.subr.mxu0 0.0
    %375 = vmatpush2.msra.mxu0 0.0
    %376 = vmatprep.subr.mxu0 0.0
    %377 = vmatpush2.msra.mxu0 0.0
    %378 = vmatprep.subr.mxu0 0.0
    %379 = vmatpush2.msra.mxu0 0.0
    %380 = vmatprep.subr.mxu0 0.0
    %381 = vmatpush2.msra.mxu0 0.0
    %382 = vmatprep.subr.mxu0 0.0
    %383 = vmatpush2.msra.mxu0 0.0
    %384 = vmatprep.mubr.f32.mxu0 0.0
    %385 = vmatmul.mubr.f32.gmra.mxu0 %v309
    %v386 = vpop.f32.mrf.mxu0
    %v387 = vadd.f32 %v290, %v386
    %v388 = vpop.f32.mrf.mxu0
    %389 = vmatprep.mubr.f32.mxu0 0.0
    %390 = vmatmul.mubr.f32.gmra.mxu0 %v312
    %v391 = vpop.f32.mrf.mxu0
    %v392 = vadd.f32 %v295, %v391
    %v393 = vpop.f32.mrf.mxu0
    %394 = vmatprep.mubr.f32.mxu0 0.0
    %395 = vmatmul.mubr.f32.gmra.mxu0 %v315
    %v396 = vpop.f32.mrf.mxu0
    %v397 = vadd.f32 %v300, %v396
    %v398 = vpop.f32.mrf.mxu0
    %399 = vmatprep.mubr.f32.mxu0 0.0
    %400 = vmatmul.mubr.f32.gmra.mxu0 %v318
    %v401 = vpop.f32.mrf.mxu0
    %v402 = vadd.f32 %v305, %v401
    %v403 = vpop.f32.mrf.mxu0
    %404 = vdwg.mxu0
    %v405 = vmax.f32 %v387, 0.0
    %v406 = vmax.f32 %v392, 0.0
    %v407 = vmax.f32 %v397, 0.0
    %v408 = vmax.f32 %v402, 0.0
    %v409 = vld [vmem:[%s7] sm:$0x1]
    %v410 = vld [vmem:[#allocation2] sm:$0x1]
    %412 = vset.pattern.permute.xlu0 0
    %413 = vperm.xlu0 %412, %v410
    %v414 = vpop.permute.xlu0 %413
    %v416 = vlaneseq
    %v417 = vshrl.u32 %v416, 7
    %v418 = vsub.s32 0, %v417
    %v419 = vrot.slane %v414, %v418
    %v421 = vsel %vm307, %v409, 0
    %423 = vmatprep.subr.mxu0 0.0
    %424 = vmatpush1.msra.mxu0 0.0
    %425 = vmatprep.subr.mxu0 0.0
    %426 = vmatpush1.msra.mxu0 0.0
    %427 = vmatprep.subr.mxu0 0.0
    %428 = vmatpush1.msra.mxu0 0.0
    %429 = vmatprep.subr.mxu0 0.0
    %430 = vmatpush1.msra.mxu0 0.0
    %431 = vmatprep.subr.mxu0 0.0
    %432 = vmatpush1.msra.mxu0 0.0
    %433 = vmatprep.subr.mxu0 0.0
    %434 = vmatpush1.msra.mxu0 0.0
    %435 = vmatprep.subr.mxu0 0.0
    %436 = vmatpush1.msra.mxu0 0.0
    %437 = vmatprep.subr.mxu0 0.0
    %438 = vmatpush1.msra.mxu0 0.0
    %439 = vmatprep.subr.mxu0 0.0
    %440 = vmatpush1.msra.mxu0 0.0
    %441 = vmatprep.subr.mxu0 0.0
    %442 = vmatpush1.msra.mxu0 0.0
    %443 = vmatprep.subr.mxu0 0.0
    %444 = vmatpush1.msra.mxu0 0.0
    %445 = vmatprep.subr.mxu0 0.0
    %446 = vmatpush1.msra.mxu0 0.0
    %447 = vmatprep.subr.mxu0 0.0
    %448 = vmatpush1.msra.mxu0 %v408
    %449 = vmatprep.subr.mxu0 0.0
    %450 = vmatpush1.msra.mxu0 %v407
    %451 = vmatprep.subr.mxu0 0.0
    %452 = vmatpush1.msra.mxu0 %v406
    %453 = vmatprep.subr.mxu0 0.0
    %454 = vmatpush1.msra.mxu0 %v405
    %455 = vmatprep.subr.mxu0 0.0
    %456 = vmatpush2.msra.mxu0 0.0
    %457 = vmatprep.subr.mxu0 0.0
    %458 = vmatpush2.msra.mxu0 0.0
    %459 = vmatprep.subr.mxu0 0.0
    %460 = vmatpush2.msra.mxu0 0.0
    %461 = vmatprep.subr.mxu0 0.0
    %462 = vmatpush2.msra.mxu0 0.0
    %463 = vmatprep.subr.mxu0 0.0
    %464 = vmatpush2.msra.mxu0 0.0
    %465 = vmatprep.subr.mxu0 0.0
    %466 = vmatpush2.msra.mxu0 0.0
    %467 = vmatprep.subr.mxu0 0.0
    %468 = vmatpush2.msra.mxu0 0.0
    %469 = vmatprep.subr.mxu0 0.0
    %470 = vmatpush2.msra.mxu0 0.0
    %471 = vmatprep.subr.mxu0 0.0
    %472 = vmatpush2.msra.mxu0 0.0
    %473 = vmatprep.subr.mxu0 0.0
    %474 = vmatpush2.msra.mxu0 0.0
    %475 = vmatprep.subr.mxu0 0.0
    %476 = vmatpush2.msra.mxu0 0.0
    %477 = vmatprep.subr.mxu0 0.0
    %478 = vmatpush2.msra.mxu0 0.0
    %479 = vmatprep.subr.mxu0 0.0
    %480 = vmatpush2.msra.mxu0 0.0
    %481 = vmatprep.subr.mxu0 0.0
    %482 = vmatpush2.msra.mxu0 0.0
    %483 = vmatprep.subr.mxu0 0.0
    %484 = vmatpush2.msra.mxu0 0.0
    %485 = vmatprep.subr.mxu0 0.0
    %486 = vmatpush2.msra.mxu0 0.0
    %487 = vmatprep.mubr.f32.mxu0 0.0
    %488 = vmatmul.mubr.f32.gmra.mxu0 %v421
    %v489 = vpop.f32.mrf.mxu0
    %v490 = vadd.f32 %v419, %v489
    %v491 = vpop.f32.mrf.mxu0
    %492 = vdwg.mxu0
    %vm493 = vcmask 8192
    %494 = vst.msk [vmem:[#allocation3] sm:$0x1] %vm493, %v490
    // Predicated region
    $region38: #{tpu_custom_call.1} parent=1 // pred_check
      _
    $region39: #{tpu_custom_call.1} parent=1 // pred_check_branch
      %496 = sbr.rel (0) target = $region41
    $region40: #{tpu_custom_call.1} parent=1 // pred_region
      %s498 = ssub.s32 16, 16
      %499 = vsyncadd [#allocation4], %s498
      %s501 = sshll.u32 [#allocation3], 4
      %s502 = int_to_ptr.vmem [resolvable:$true] %s501
      %504 = dma.vmem_to_hbm [thread:$0]  %s502, 16, %s9, [#allocation4]
    $region41: #{tpu_custom_call.1} parent=1 // pred_fallthru
      _
    // Predicated region
    $region42: #{tpu_custom_call.1} parent=1 // pred_check
      _
    $region43: #{tpu_custom_call.1} parent=1 // pred_check_branch
      %506 = sbr.rel (0) target = $region45
    $region44: #{tpu_custom_call.1} parent=1 // pred_region
      %507 = dma.done [#allocation4], 16
    $region45: #{tpu_custom_call.1} parent=1 // pred_fallthru
      _
    %508 = vsyncpa [#allocation4], 1

</llo_original>
